<compile_context>
chip_gen: v5e
topology: v5e:2x2
jax: 0.10.0
libtpu: 0.0.40
codegen_flags: <defaults>
</compile_context>

<pallas_src>
import functools

import jax
import jax.numpy as jnp
from jax import lax
from jax.experimental import pallas as pl
from jax.experimental.pallas import tpu as pltpu


def _round_up(x, m):
    return (x + m - 1) // m * m


# ---------------------------------------------------------------------------
# Fused Pallas kernel:
#   conv1 + BN1 + ReLU  ->  conv2 + BN2 + ShakeDrop(eval) + residual + ReLU
# ---------------------------------------------------------------------------
def _shake_drop_res_unit_kernel(lp_ref, x_ref, id_ref, mask_ref,
                                w1_ref, t1_ref, w2_ref, t2_ref,
                                o_ref, h1_ref, stk_ref, *, Wp, base):
    B_t, C, Qc = o_ref.shape
    qh = h1_ref.shape[1]
    tail = qh - base - Qc

    # Re-zero ONLY the halo margins of the h1 staging buffer (cheap: 2*128
    # lanes of bf16).  The interior border ring and lanes beyond Q are zeroed
    # by the mask multiply below, so no full-buffer zero is needed, and this
    # stays correct under megacore sharding of the "parallel" batch axis.
    h1_ref[:, pl.ds(0, base)] = jnp.zeros((C, base), jnp.bfloat16)
    h1_ref[:, pl.ds(base + Qc, tail)] = jnp.zeros((C, tail), jnp.bfloat16)

    lp = lp_ref[0, 0]
    mask = mask_ref[...]                 # (1, Qc) f32: interior of padded grid
    w1 = w1_ref[...]                     # (C, 9C) bf16, BN1 scale folded in
    w2 = w2_ref[...]                     # (C, 9C) bf16, BN2 scale folded in
    t1 = t1_ref[...]                     # (C, 1) f32 BN shift
    t2 = t2_ref[...]

    def build_stacked(tap):
        # Stage the 9 lane-shifted 3x3 tap windows as one (9C, Qc) bf16 operand.
        # TODO(synk): if XLU binds (2 units on v6e/v7x), derive column shifts
        # from a shared row window instead of 9 independent unaligned slices.
        for kh in range(3):
            for kw in range(3):
                t = kh * 3 + kw
                off = base + (kh - 1) * Wp + (kw - 1)
                stk_ref[pl.ds(t * C, C), :] = tap(off)

    for b in range(B_t):
        # conv1 + folded BN1 + ReLU -> h1 staged in VMEM (bf16, never hits HBM).
        build_stacked(lambda off: x_ref[b, :, pl.ds(off, Qc)])
        acc1 = jnp.dot(w1, stk_ref[...], preferred_element_type=jnp.float32)
        h1 = jnp.maximum(acc1 + t1, 0.0) * mask
        h1_ref[:, pl.ds(base, Qc)] = h1.astype(jnp.bfloat16)

        # conv2 + folded BN2 + eval-mode ShakeDrop scale + f32 residual + ReLU.
        # TODO(synk): training-mode ShakeDrop (bernoulli gate + per-sample
        # uniform alpha) is stochastic; only the eval path is implemented.
        build_stacked(lambda off: h1_ref[:, pl.ds(off, Qc)])
        acc2 = jnp.dot(w2, stk_ref[...], preferred_element_type=jnp.float32)
        y = jnp.maximum(lp * (acc2 + t2) + id_ref[b], 0.0)
        o_ref[b] = y.astype(o_ref.dtype)


# ---------------------------------------------------------------------------
# Wrapper: parameter folding, flat-spatial layout plumbing, pallas_call
# ---------------------------------------------------------------------------
def _fold_bn_into_conv(w_hwio, gamma, beta, mean, var, eps=1e-5):
    """Fold eval-mode BatchNorm into the conv: a (Cout, 9*Cin) bf16 weight with
    the BN scale pre-folded (rows ordered tap-major to match the stacked
    operand), plus a (Cout, 1) f32 shift for the f32 epilogue."""
    s = gamma * lax.rsqrt(var + eps)
    t = (beta - mean * s).astype(jnp.float32)
    kh, kw, cin, cout = w_hwio.shape
    wf = w_hwio.astype(jnp.float32) * s                     # scale on Cout axis
    wt = jnp.transpose(wf, (3, 0, 1, 2)).reshape(cout, kh * kw * cin)
    return wt.astype(jnp.bfloat16), t.reshape(cout, 1)


def shake_drop_res_unit(x_nchw, params, life_prob, *, batch_block=1):
    """Eval-mode ShakeDropResUnit forward (ResBlock body, stride=1, Cin==Cout)."""
    # TODO(synk): the resize_identity branch is not implementable faithfully —
    # the reference sets self.identity_conv = None and would crash; only the
    # stride=1 / Cin==Cout configuration is supported.
    n, c, h, w = x_nchw.shape
    hp, wp = h + 2, w + 2
    q = hp * wp
    assert wp + 1 <= 128, "spatial width too large for the single-slab layout"
    assert n % batch_block == 0
    bt = batch_block

    qc = _round_up(q, 128)            # lane-dense compute / output width
    base = 128                        # left halo margin (>= Wp+1, lane aligned)
    qh = base + qc + 128              # extended flat-spatial width with halos

    # bf16 matmul operand: cast BEFORE padding (halves the wrapper-side pad
    # traffic); pad spatial by 1, flatten (Hp,Wp)->Q on lanes, add halos.
    xb = jnp.pad(x_nchw.astype(jnp.bfloat16), ((0, 0), (0, 0), (1, 1), (1, 1)))
    xe = jnp.pad(xb.reshape(n, c, q), ((0, 0), (0, 0), (base, qh - base - q)))

    # f32 identity in the output's flat-padded layout (skip path stays f32).
    ident = jnp.pad(x_nchw.astype(jnp.float32), ((0, 0), (0, 0), (1, 1), (1, 1)))
    ident = jnp.pad(ident.reshape(n, c, q), ((0, 0), (0, 0), (0, qc - q)))

    # Interior mask of the padded grid, widened to the lane-dense width.
    rr = jnp.arange(q, dtype=jnp.int32) // wp
    cc = jnp.arange(q, dtype=jnp.int32) % wp
    interior = (rr >= 1) & (rr <= h) & (cc >= 1) & (cc <= w)
    mask = jnp.pad(interior.astype(jnp.float32), (0, qc - q)).reshape(1, qc)

    w1t, t1 = _fold_bn_into_conv(params["w1"], params["g1"], params["b1"],
                                 params["m1"], params["v1"])
    w2t, t2 = _fold_bn_into_conv(params["w2"], params["g2"], params["b2"],
                                 params["m2"], params["v2"])
    lp = jnp.full((1, 1), life_prob, dtype=jnp.float32)

    kernel = functools.partial(_shake_drop_res_unit_kernel, Wp=wp, base=base)

    # VMEM budget: never below the 32 MiB scoped default; grows automatically
    # with block sizes (v5e/v6e have 128 MiB physical — don't cap big blocks).
    work = (2 * bt * c * qh * 2                 # double-buffered bf16 x blocks
            + 2 * bt * c * qc * (4 + 4)         # double-buffered f32 ident + out
            + c * qh * 2 + 9 * c * qc * 2)      # h1 + tap-stacked scratch
    vmem_limit = int(max(32 * 1024 * 1024, 4 * work))

    # TODO(synk): for production H,W,C add a second "parallel" grid axis tiling
    # the flat-spatial lanes with a (Wp+1)-lane halo so the per-step working
    # set fits v7x's 64 MiB VMEM and both TensorCores get enough grid points.
    out_flat = pl.pallas_call(
        kernel,
        out_shape=jax.ShapeDtypeStruct((n, c, qc), jnp.float32),
        grid_spec=pltpu.PrefetchScalarGridSpec(
            num_scalar_prefetch=0,
            grid=(n // bt,),
            in_specs=[
                pl.BlockSpec(memory_space=pltpu.MemorySpace.SMEM),  # life_prob
                pl.BlockSpec((bt, c, qh), lambda i: (i, 0, 0)),     # x (bf16, halos)
                pl.BlockSpec((bt, c, qc), lambda i: (i, 0, 0)),     # identity (f32)
                pl.BlockSpec((1, qc), lambda i: (0, 0)),            # interior mask
                pl.BlockSpec((c, 9 * c), lambda i: (0, 0)),         # w1 (BN folded)
                pl.BlockSpec((c, 1), lambda i: (0, 0)),             # t1
                pl.BlockSpec((c, 9 * c), lambda i: (0, 0)),         # w2 (BN folded)
                pl.BlockSpec((c, 1), lambda i: (0, 0)),             # t2
            ],
            out_specs=pl.BlockSpec((bt, c, qc), lambda i: (i, 0, 0)),
            scratch_shapes=[
                pltpu.VMEM((c, qh), jnp.bfloat16),       # h1 staging (+ halos)
                pltpu.VMEM((9 * c, qc), jnp.bfloat16),   # tap-stacked operand
            ],
        ),
        compiler_params=pltpu.CompilerParams(
            dimension_semantics=("parallel",),
            vmem_limit_bytes=vmem_limit,
        ),
    )(lp, xe, ident, mask, w1t, t1, w2t, t2)

    # Crop the lane-dense padded grid back to NCHW.
    return out_flat[:, :, :q].reshape(n, c, hp, wp)[:, :, 1:h + 1, 1:w + 1]


# ---------------------------------------------------------------------------
# Pure-JAX (f32) reference for verification
# ---------------------------------------------------------------------------
def _reference(x_nchw, params, life_prob, eps=1e-5):
    x = jnp.transpose(x_nchw, (0, 2, 3, 1)).astype(jnp.float32)

    def conv3x3(inp, wt):
        return lax.conv_general_dilated(
            inp, wt, (1, 1), "SAME", dimension_numbers=("NHWC", "HWIO", "NHWC"))

    def bn(v, g, b, m, var):
        s = g * lax.rsqrt(var + eps)
        return v * s + (b - m * s)

    h1 = jnp.maximum(bn(conv3x3(x, params["w1"]), params["g1"], params["b1"],
                        params["m1"], params["v1"]), 0.0)
    body = bn(conv3x3(h1, params["w2"]), params["g2"], params["b2"],
              params["m2"], params["v2"])
    y = jnp.maximum(life_prob * body + x, 0.0)
    return jnp.transpose(y, (0, 3, 1, 2))


# ---------------------------------------------------------------------------
if __name__ == "__main__":
    N, C, H, W = 2, 4, 16, 16        # in_channels == out_channels, stride == 1
    LIFE_PROB = 0.9

    key = jax.random.PRNGKey(0)
    ks = jax.random.split(key, 11)
    x = jax.random.normal(ks[0], (N, C, H, W), jnp.float32)

    params = {
        # conv weights in HWIO layout (3,3,Cin,Cout), bias=False like ResBlock
        "w1": 0.2 * jax.random.normal(ks[1], (3, 3, C, C), jnp.float32),
        "w2": 0.2 * jax.random.normal(ks[2], (3, 3, C, C), jnp.float32),
        # BatchNorm (eval-mode running stats), initialized deterministically
        "g1": 1.0 + 0.1 * jax.random.normal(ks[3], (C,), jnp.float32),
        "b1": 0.1 * jax.random.normal(ks[4], (C,), jnp.float32),
        "m1": 0.1 * jax.random.normal(ks[5], (C,), jnp.float32),
        "v1": 0.5 + jnp.abs(jax.random.normal(ks[6], (C,), jnp.float32)),
        "g2": 1.0 + 0.1 * jax.random.normal(ks[7], (C,), jnp.float32),
        "b2": 0.1 * jax.random.normal(ks[8], (C,), jnp.float32),
        "m2": 0.1 * jax.random.normal(ks[9], (C,), jnp.float32),
        "v2": 0.5 + jnp.abs(jax.random.normal(ks[10], (C,), jnp.float32)),
    }

    ref = _reference(x, params, LIFE_PROB)

    # Exercise both the multi-step grid path (1 sample / step) and the
    # batched-samples-per-step path (2 samples / step).
    for bt in (1, 2):
        out = shake_drop_res_unit(x, params, LIFE_PROB, batch_block=bt)
        out = jax.block_until_ready(out)
        assert out.shape == (N, C, H, W)
        # Matmul operands are bf16 (f32 accumulation / f32 epilogue + f32 skip
        # path), so compare against the pure-f32 reference with a
        # bf16-appropriate tolerance; any structural bug (tap offsets, mask,
        # residual, scaling) produces O(1) error.
        assert jnp.allclose(out, ref, atol=1e-1, rtol=1e-2), (
            f"mismatch vs JAX reference (batch_block={bt}); max abs err = "
            f"{float(jnp.max(jnp.abs(out - ref)))}")

    print("KERNEL_OK")
</pallas_src>

<mosaic_0001>
module attributes {stable_mosaic.version = 11 : i64} {
  func.func @_shake_drop_res_unit_kernel(%arg0: i32, %arg1: memref<1x1xf32, #tpu.memory_space<smem>>, %arg2: memref<1x4x640xbf16, #tpu.memory_space<vmem>>, %arg3: memref<1x4x384xf32, #tpu.memory_space<vmem>>, %arg4: memref<1x384xf32, #tpu.memory_space<vmem>>, %arg5: memref<4x36xbf16, #tpu.memory_space<vmem>>, %arg6: memref<4x1xf32, #tpu.memory_space<vmem>>, %arg7: memref<4x36xbf16, #tpu.memory_space<vmem>>, %arg8: memref<4x1xf32, #tpu.memory_space<vmem>>, %arg9: memref<1x4x384xf32, #tpu.memory_space<vmem>>, %arg10: memref<4x640xbf16, #tpu.memory_space<vmem>>, %arg11: memref<36x384xbf16, #tpu.memory_space<vmem>>) attributes {dimension_semantics = [#tpu.dimension_semantics<parallel>], iteration_bounds = array<i64: 2>, scalar_prefetch = 0 : i64, scratch_operands = 2 : i64, tpu.core_type = #tpu.core_type<tc>, window_params = [{transform_indices = @transform_0, window_bounds = array<i64: 1, 1>}, {transform_indices = @transform_1, window_bounds = array<i64: 1, 4, 640>}, {transform_indices = @transform_2, window_bounds = array<i64: 1, 4, 384>}, {pipeline_mode = #tpu.pipeline_mode<synchronous>, transform_indices = @transform_3, window_bounds = array<i64: 1, 384>}, {pipeline_mode = #tpu.pipeline_mode<synchronous>, transform_indices = @transform_4, window_bounds = array<i64: 4, 36>}, {pipeline_mode = #tpu.pipeline_mode<synchronous>, transform_indices = @transform_5, window_bounds = array<i64: 4, 1>}, {pipeline_mode = #tpu.pipeline_mode<synchronous>, transform_indices = @transform_6, window_bounds = array<i64: 4, 36>}, {pipeline_mode = #tpu.pipeline_mode<synchronous>, transform_indices = @transform_7, window_bounds = array<i64: 4, 1>}, {transform_indices = @transform_8, window_bounds = array<i64: 1, 4, 384>}]} {
    %cst = arith.constant 0.000000e+00 : bf16
    %0 = vector.broadcast %cst : bf16 to vector<4x128xbf16>
    %c0 = arith.constant 0 : index
    %c0_0 = arith.constant 0 : index
    %1 = vector.load %arg10[%c0, %c0_0] : memref<4x640xbf16, #tpu.memory_space<vmem>>, vector<4x128xbf16>
    tpu.vector_store %arg10[%c0, %c0_0], %0 {strides = array<i32>} : memref<4x640xbf16, #tpu.memory_space<vmem>>, vector<4x128xbf16>,
    %cst_1 = arith.constant 0.000000e+00 : bf16
    %2 = vector.broadcast %cst_1 : bf16 to vector<4x128xbf16>
    %c0_2 = arith.constant 0 : index
    %c512 = arith.constant 512 : index
    %3 = vector.load %arg10[%c0_2, %c512] : memref<4x640xbf16, #tpu.memory_space<vmem>>, vector<4x128xbf16>
    tpu.vector_store %arg10[%c0_2, %c512], %2 {strides = array<i32>} : memref<4x640xbf16, #tpu.memory_space<vmem>>, vector<4x128xbf16>,
    %c0_3 = arith.constant 0 : index
    %c0_4 = arith.constant 0 : index
    %4 = memref.load %arg1[%c0_3, %c0_4] : memref<1x1xf32, #tpu.memory_space<smem>>
    %c0_5 = arith.constant 0 : index
    %c0_6 = arith.constant 0 : index
    %5 = vector.load %arg4[%c0_5, %c0_6] : memref<1x384xf32, #tpu.memory_space<vmem>>, vector<1x384xf32>
    %c0_7 = arith.constant 0 : index
    %c0_8 = arith.constant 0 : index
    %6 = vector.load %arg5[%c0_7, %c0_8] : memref<4x36xbf16, #tpu.memory_space<vmem>>, vector<4x36xbf16>
    %c0_9 = arith.constant 0 : index
    %c0_10 = arith.constant 0 : index
    %7 = vector.load %arg7[%c0_9, %c0_10] : memref<4x36xbf16, #tpu.memory_space<vmem>>, vector<4x36xbf16>
    %c0_11 = arith.constant 0 : index
    %c0_12 = arith.constant 0 : index
    %8 = vector.load %arg6[%c0_11, %c0_12] : memref<4x1xf32, #tpu.memory_space<vmem>>, vector<4x1xf32>
    %c0_13 = arith.constant 0 : index
    %c0_14 = arith.constant 0 : index
    %9 = vector.load %arg8[%c0_13, %c0_14] : memref<4x1xf32, #tpu.memory_space<vmem>>, vector<4x1xf32>
    %c0_15 = arith.constant 0 : index
    %c0_16 = arith.constant 0 : index
    %c109 = arith.constant 109 : index
    %10 = vector.load %arg2[%c0_15, %c0_16, %c109] : memref<1x4x640xbf16, #tpu.memory_space<vmem>>, vector<1x4x384xbf16>
    %11 = vector.shape_cast %10 : vector<1x4x384xbf16> to vector<4x384xbf16>
    %c0_17 = arith.constant 0 : index
    %c0_18 = arith.constant 0 : index
    %12 = vector.load %arg11[%c0_17, %c0_18] : memref<36x384xbf16, #tpu.memory_space<vmem>>, vector<4x384xbf16>
    tpu.vector_store %arg11[%c0_17, %c0_18], %11 {strides = array<i32>} : memref<36x384xbf16, #tpu.memory_space<vmem>>, vector<4x384xbf16>,
    %c0_19 = arith.constant 0 : index
    %c0_20 = arith.constant 0 : index
    %c110 = arith.constant 110 : index
    %13 = vector.load %arg2[%c0_19, %c0_20, %c110] : memref<1x4x640xbf16, #tpu.memory_space<vmem>>, vector<1x4x384xbf16>
    %14 = vector.shape_cast %13 : vector<1x4x384xbf16> to vector<4x384xbf16>
    %c4 = arith.constant 4 : index
    %c0_21 = arith.constant 0 : index
    %15 = vector.load %arg11[%c4, %c0_21] : memref<36x384xbf16, #tpu.memory_space<vmem>>, vector<4x384xbf16>
    tpu.vector_store %arg11[%c4, %c0_21], %14 {strides = array<i32>} : memref<36x384xbf16, #tpu.memory_space<vmem>>, vector<4x384xbf16>,
    %c0_22 = arith.constant 0 : index
    %c0_23 = arith.constant 0 : index
    %c111 = arith.constant 111 : index
    %16 = vector.load %arg2[%c0_22, %c0_23, %c111] : memref<1x4x640xbf16, #tpu.memory_space<vmem>>, vector<1x4x384xbf16>
    %17 = vector.shape_cast %16 : vector<1x4x384xbf16> to vector<4x384xbf16>
    %c8 = arith.constant 8 : index
    %c0_24 = arith.constant 0 : index
    %18 = vector.load %arg11[%c8, %c0_24] : memref<36x384xbf16, #tpu.memory_space<vmem>>, vector<4x384xbf16>
    tpu.vector_store %arg11[%c8, %c0_24], %17 {strides = array<i32>} : memref<36x384xbf16, #tpu.memory_space<vmem>>, vector<4x384xbf16>,
    %c0_25 = arith.constant 0 : index
    %c0_26 = arith.constant 0 : index
    %c127 = arith.constant 127 : index
    %19 = vector.load %arg2[%c0_25, %c0_26, %c127] : memref<1x4x640xbf16, #tpu.memory_space<vmem>>, vector<1x4x384xbf16>
    %20 = vector.shape_cast %19 : vector<1x4x384xbf16> to vector<4x384xbf16>
    %c12 = arith.constant 12 : index
    %c0_27 = arith.constant 0 : index
    %21 = vector.load %arg11[%c12, %c0_27] : memref<36x384xbf16, #tpu.memory_space<vmem>>, vector<4x384xbf16>
    tpu.vector_store %arg11[%c12, %c0_27], %20 {strides = array<i32>} : memref<36x384xbf16, #tpu.memory_space<vmem>>, vector<4x384xbf16>,
    %c0_28 = arith.constant 0 : index
    %c0_29 = arith.constant 0 : index
    %c128 = arith.constant 128 : index
    %22 = vector.load %arg2[%c0_28, %c0_29, %c128] : memref<1x4x640xbf16, #tpu.memory_space<vmem>>, vector<1x4x384xbf16>
    %23 = vector.shape_cast %22 : vector<1x4x384xbf16> to vector<4x384xbf16>
    %c16 = arith.constant 16 : index
    %c0_30 = arith.constant 0 : index
    %24 = vector.load %arg11[%c16, %c0_30] : memref<36x384xbf16, #tpu.memory_space<vmem>>, vector<4x384xbf16>
    tpu.vector_store %arg11[%c16, %c0_30], %23 {strides = array<i32>} : memref<36x384xbf16, #tpu.memory_space<vmem>>, vector<4x384xbf16>,
    %c0_31 = arith.constant 0 : index
    %c0_32 = arith.constant 0 : index
    %c129 = arith.constant 129 : index
    %25 = vector.load %arg2[%c0_31, %c0_32, %c129] : memref<1x4x640xbf16, #tpu.memory_space<vmem>>, vector<1x4x384xbf16>
    %26 = vector.shape_cast %25 : vector<1x4x384xbf16> to vector<4x384xbf16>
    %c20 = arith.constant 20 : index
    %c0_33 = arith.constant 0 : index
    %27 = vector.load %arg11[%c20, %c0_33] : memref<36x384xbf16, #tpu.memory_space<vmem>>, vector<4x384xbf16>
    tpu.vector_store %arg11[%c20, %c0_33], %26 {strides = array<i32>} : memref<36x384xbf16, #tpu.memory_space<vmem>>, vector<4x384xbf16>,
    %c0_34 = arith.constant 0 : index
    %c0_35 = arith.constant 0 : index
    %c145 = arith.constant 145 : index
    %28 = vector.load %arg2[%c0_34, %c0_35, %c145] : memref<1x4x640xbf16, #tpu.memory_space<vmem>>, vector<1x4x384xbf16>
    %29 = vector.shape_cast %28 : vector<1x4x384xbf16> to vector<4x384xbf16>
    %c24 = arith.constant 24 : index
    %c0_36 = arith.constant 0 : index
    %30 = vector.load %arg11[%c24, %c0_36] : memref<36x384xbf16, #tpu.memory_space<vmem>>, vector<4x384xbf16>
    tpu.vector_store %arg11[%c24, %c0_36], %29 {strides = array<i32>} : memref<36x384xbf16, #tpu.memory_space<vmem>>, vector<4x384xbf16>,
    %c0_37 = arith.constant 0 : index
    %c0_38 = arith.constant 0 : index
    %c146 = arith.constant 146 : index
    %31 = vector.load %arg2[%c0_37, %c0_38, %c146] : memref<1x4x640xbf16, #tpu.memory_space<vmem>>, vector<1x4x384xbf16>
    %32 = vector.shape_cast %31 : vector<1x4x384xbf16> to vector<4x384xbf16>
    %c28 = arith.constant 28 : index
    %c0_39 = arith.constant 0 : index
    %33 = vector.load %arg11[%c28, %c0_39] : memref<36x384xbf16, #tpu.memory_space<vmem>>, vector<4x384xbf16>
    tpu.vector_store %arg11[%c28, %c0_39], %32 {strides = array<i32>} : memref<36x384xbf16, #tpu.memory_space<vmem>>, vector<4x384xbf16>,
    %c0_40 = arith.constant 0 : index
    %c0_41 = arith.constant 0 : index
    %c147 = arith.constant 147 : index
    %34 = vector.load %arg2[%c0_40, %c0_41, %c147] : memref<1x4x640xbf16, #tpu.memory_space<vmem>>, vector<1x4x384xbf16>
    %35 = vector.shape_cast %34 : vector<1x4x384xbf16> to vector<4x384xbf16>
    %c32 = arith.constant 32 : index
    %c0_42 = arith.constant 0 : index
    %36 = vector.load %arg11[%c32, %c0_42] : memref<36x384xbf16, #tpu.memory_space<vmem>>, vector<4x384xbf16>
    tpu.vector_store %arg11[%c32, %c0_42], %35 {strides = array<i32>} : memref<36x384xbf16, #tpu.memory_space<vmem>>, vector<4x384xbf16>,
    %c0_43 = arith.constant 0 : index
    %c0_44 = arith.constant 0 : index
    %37 = vector.load %arg11[%c0_43, %c0_44] : memref<36x384xbf16, #tpu.memory_space<vmem>>, vector<36x384xbf16>
    %cst_45 = arith.constant dense<0.000000e+00> : vector<4x384xf32>
    %38 = tpu.matmul %6, %37, %cst_45 {dimension_numbers = #tpu.dot_dimension_numbers<[1], [0], [0], [1], [0, 0, 1, 1], [], []>} : vector<4x36xbf16>, vector<36x384xbf16>, vector<4x384xf32> -> vector<4x384xf32>
    %39 = vector.broadcast %8 : vector<4x1xf32> to vector<4x384xf32>
    %40 = arith.addf %38, %39 : vector<4x384xf32>
    %cst_46 = arith.constant 0.000000e+00 : f32
    %41 = vector.broadcast %cst_46 : f32 to vector<4x384xf32>
    %42 = arith.maximumf %40, %41 : vector<4x384xf32>
    %43 = vector.broadcast %5 : vector<1x384xf32> to vector<4x384xf32>
    %44 = arith.mulf %42, %43 : vector<4x384xf32>
    %45 = arith.truncf %44 : vector<4x384xf32> to vector<4x384xbf16>
    %c0_47 = arith.constant 0 : index
    %c128_48 = arith.constant 128 : index
    %46 = vector.load %arg10[%c0_47, %c128_48] : memref<4x640xbf16, #tpu.memory_space<vmem>>, vector<4x384xbf16>
    tpu.vector_store %arg10[%c0_47, %c128_48], %45 {strides = array<i32>} : memref<4x640xbf16, #tpu.memory_space<vmem>>, vector<4x384xbf16>,
    %c0_49 = arith.constant 0 : index
    %c109_50 = arith.constant 109 : index
    %47 = vector.load %arg10[%c0_49, %c109_50] : memref<4x640xbf16, #tpu.memory_space<vmem>>, vector<4x384xbf16>
    %c0_51 = arith.constant 0 : index
    %c0_52 = arith.constant 0 : index
    %48 = vector.load %arg11[%c0_51, %c0_52] : memref<36x384xbf16, #tpu.memory_space<vmem>>, vector<4x384xbf16>
    tpu.vector_store %arg11[%c0_51, %c0_52], %47 {strides = array<i32>} : memref<36x384xbf16, #tpu.memory_space<vmem>>, vector<4x384xbf16>,
    %c0_53 = arith.constant 0 : index
    %c110_54 = arith.constant 110 : index
    %49 = vector.load %arg10[%c0_53, %c110_54] : memref<4x640xbf16, #tpu.memory_space<vmem>>, vector<4x384xbf16>
    %c4_55 = arith.constant 4 : index
    %c0_56 = arith.constant 0 : index
    %50 = vector.load %arg11[%c4_55, %c0_56] : memref<36x384xbf16, #tpu.memory_space<vmem>>, vector<4x384xbf16>
    tpu.vector_store %arg11[%c4_55, %c0_56], %49 {strides = array<i32>} : memref<36x384xbf16, #tpu.memory_space<vmem>>, vector<4x384xbf16>,
    %c0_57 = arith.constant 0 : index
    %c111_58 = arith.constant 111 : index
    %51 = vector.load %arg10[%c0_57, %c111_58] : memref<4x640xbf16, #tpu.memory_space<vmem>>, vector<4x384xbf16>
    %c8_59 = arith.constant 8 : index
    %c0_60 = arith.constant 0 : index
    %52 = vector.load %arg11[%c8_59, %c0_60] : memref<36x384xbf16, #tpu.memory_space<vmem>>, vector<4x384xbf16>
    tpu.vector_store %arg11[%c8_59, %c0_60], %51 {strides = array<i32>} : memref<36x384xbf16, #tpu.memory_space<vmem>>, vector<4x384xbf16>,
    %c0_61 = arith.constant 0 : index
    %c127_62 = arith.constant 127 : index
    %53 = vector.load %arg10[%c0_61, %c127_62] : memref<4x640xbf16, #tpu.memory_space<vmem>>, vector<4x384xbf16>
    %c12_63 = arith.constant 12 : index
    %c0_64 = arith.constant 0 : index
    %54 = vector.load %arg11[%c12_63, %c0_64] : memref<36x384xbf16, #tpu.memory_space<vmem>>, vector<4x384xbf16>
    tpu.vector_store %arg11[%c12_63, %c0_64], %53 {strides = array<i32>} : memref<36x384xbf16, #tpu.memory_space<vmem>>, vector<4x384xbf16>,
    %c0_65 = arith.constant 0 : index
    %c128_66 = arith.constant 128 : index
    %55 = vector.load %arg10[%c0_65, %c128_66] : memref<4x640xbf16, #tpu.memory_space<vmem>>, vector<4x384xbf16>
    %c16_67 = arith.constant 16 : index
    %c0_68 = arith.constant 0 : index
    %56 = vector.load %arg11[%c16_67, %c0_68] : memref<36x384xbf16, #tpu.memory_space<vmem>>, vector<4x384xbf16>
    tpu.vector_store %arg11[%c16_67, %c0_68], %55 {strides = array<i32>} : memref<36x384xbf16, #tpu.memory_space<vmem>>, vector<4x384xbf16>,
    %c0_69 = arith.constant 0 : index
    %c129_70 = arith.constant 129 : index
    %57 = vector.load %arg10[%c0_69, %c129_70] : memref<4x640xbf16, #tpu.memory_space<vmem>>, vector<4x384xbf16>
    %c20_71 = arith.constant 20 : index
    %c0_72 = arith.constant 0 : index
    %58 = vector.load %arg11[%c20_71, %c0_72] : memref<36x384xbf16, #tpu.memory_space<vmem>>, vector<4x384xbf16>
    tpu.vector_store %arg11[%c20_71, %c0_72], %57 {strides = array<i32>} : memref<36x384xbf16, #tpu.memory_space<vmem>>, vector<4x384xbf16>,
    %c0_73 = arith.constant 0 : index
    %c145_74 = arith.constant 145 : index
    %59 = vector.load %arg10[%c0_73, %c145_74] : memref<4x640xbf16, #tpu.memory_space<vmem>>, vector<4x384xbf16>
    %c24_75 = arith.constant 24 : index
    %c0_76 = arith.constant 0 : index
    %60 = vector.load %arg11[%c24_75, %c0_76] : memref<36x384xbf16, #tpu.memory_space<vmem>>, vector<4x384xbf16>
    tpu.vector_store %arg11[%c24_75, %c0_76], %59 {strides = array<i32>} : memref<36x384xbf16, #tpu.memory_space<vmem>>, vector<4x384xbf16>,
    %c0_77 = arith.constant 0 : index
    %c146_78 = arith.constant 146 : index
    %61 = vector.load %arg10[%c0_77, %c146_78] : memref<4x640xbf16, #tpu.memory_space<vmem>>, vector<4x384xbf16>
    %c28_79 = arith.constant 28 : index
    %c0_80 = arith.constant 0 : index
    %62 = vector.load %arg11[%c28_79, %c0_80] : memref<36x384xbf16, #tpu.memory_space<vmem>>, vector<4x384xbf16>
    tpu.vector_store %arg11[%c28_79, %c0_80], %61 {strides = array<i32>} : memref<36x384xbf16, #tpu.memory_space<vmem>>, vector<4x384xbf16>,
    %c0_81 = arith.constant 0 : index
    %c147_82 = arith.constant 147 : index
    %63 = vector.load %arg10[%c0_81, %c147_82] : memref<4x640xbf16, #tpu.memory_space<vmem>>, vector<4x384xbf16>
    %c32_83 = arith.constant 32 : index
    %c0_84 = arith.constant 0 : index
    %64 = vector.load %arg11[%c32_83, %c0_84] : memref<36x384xbf16, #tpu.memory_space<vmem>>, vector<4x384xbf16>
    tpu.vector_store %arg11[%c32_83, %c0_84], %63 {strides = array<i32>} : memref<36x384xbf16, #tpu.memory_space<vmem>>, vector<4x384xbf16>,
    %c0_85 = arith.constant 0 : index
    %c0_86 = arith.constant 0 : index
    %65 = vector.load %arg11[%c0_85, %c0_86] : memref<36x384xbf16, #tpu.memory_space<vmem>>, vector<36x384xbf16>
    %cst_87 = arith.constant dense<0.000000e+00> : vector<4x384xf32>
    %66 = tpu.matmul %7, %65, %cst_87 {dimension_numbers = #tpu.dot_dimension_numbers<[1], [0], [0], [1], [0, 0, 1, 1], [], []>} : vector<4x36xbf16>, vector<36x384xbf16>, vector<4x384xf32> -> vector<4x384xf32>
    %67 = vector.broadcast %9 : vector<4x1xf32> to vector<4x384xf32>
    %68 = arith.addf %66, %67 : vector<4x384xf32>
    %69 = vector.broadcast %4 : f32 to vector<4x384xf32>
    %70 = arith.mulf %69, %68 : vector<4x384xf32>
    %c0_88 = arith.constant 0 : index
    %c0_89 = arith.constant 0 : index
    %c0_90 = arith.constant 0 : index
    %71 = vector.load %arg3[%c0_88, %c0_89, %c0_90] : memref<1x4x384xf32, #tpu.memory_space<vmem>>, vector<1x4x384xf32>
    %72 = vector.shape_cast %71 : vector<1x4x384xf32> to vector<4x384xf32>
    %73 = arith.addf %70, %72 : vector<4x384xf32>
    %cst_91 = arith.constant 0.000000e+00 : f32
    %74 = vector.broadcast %cst_91 : f32 to vector<4x384xf32>
    %75 = arith.maximumf %73, %74 : vector<4x384xf32>
    %c0_92 = arith.constant 0 : index
    %c0_93 = arith.constant 0 : index
    %c0_94 = arith.constant 0 : index
    %76 = vector.load %arg9[%c0_92, %c0_93, %c0_94] : memref<1x4x384xf32, #tpu.memory_space<vmem>>, vector<1x4x384xf32>
    %77 = vector.shape_cast %76 : vector<1x4x384xf32> to vector<4x384xf32>
    %78 = vector.shape_cast %75 : vector<4x384xf32> to vector<1x4x384xf32>
    tpu.vector_store %arg9[%c0_92, %c0_93, %c0_94], %78 {strides = array<i32>} : memref<1x4x384xf32, #tpu.memory_space<vmem>>, vector<1x4x384xf32>,
    return
  }
  func.func @transform_0(%arg0: i32) -> (i32, i32) {
    %c0_i32 = arith.constant 0 : i32
    %c0_i32_0 = arith.constant 0 : i32
    %c0_i32_1 = arith.constant 0 : i32
    return %c0_i32, %c0_i32_0 : i32, i32
  }
  func.func @transform_1(%arg0: i32) -> (i32, i32, i32) {
    %c0_i32 = arith.constant 0 : i32
    %c0_i32_0 = arith.constant 0 : i32
    %c0_i32_1 = arith.constant 0 : i32
    return %arg0, %c0_i32, %c0_i32_0 : i32, i32, i32
  }
  func.func @transform_2(%arg0: i32) -> (i32, i32, i32) {
    %c0_i32 = arith.constant 0 : i32
    %c0_i32_0 = arith.constant 0 : i32
    %c0_i32_1 = arith.constant 0 : i32
    return %arg0, %c0_i32, %c0_i32_0 : i32, i32, i32
  }
  func.func @transform_3(%arg0: i32) -> (i32, i32) {
    %c0_i32 = arith.constant 0 : i32
    %c0_i32_0 = arith.constant 0 : i32
    %c0_i32_1 = arith.constant 0 : i32
    return %c0_i32, %c0_i32_0 : i32, i32
  }
  func.func @transform_4(%arg0: i32) -> (i32, i32) {
    %c0_i32 = arith.constant 0 : i32
    %c0_i32_0 = arith.constant 0 : i32
    %c0_i32_1 = arith.constant 0 : i32
    return %c0_i32, %c0_i32_0 : i32, i32
  }
  func.func @transform_5(%arg0: i32) -> (i32, i32) {
    %c0_i32 = arith.constant 0 : i32
    %c0_i32_0 = arith.constant 0 : i32
    %c0_i32_1 = arith.constant 0 : i32
    return %c0_i32, %c0_i32_0 : i32, i32
  }
  func.func @transform_6(%arg0: i32) -> (i32, i32) {
    %c0_i32 = arith.constant 0 : i32
    %c0_i32_0 = arith.constant 0 : i32
    %c0_i32_1 = arith.constant 0 : i32
    return %c0_i32, %c0_i32_0 : i32, i32
  }
  func.func @transform_7(%arg0: i32) -> (i32, i32) {
    %c0_i32 = arith.constant 0 : i32
    %c0_i32_0 = arith.constant 0 : i32
    %c0_i32_1 = arith.constant 0 : i32
    return %c0_i32, %c0_i32_0 : i32, i32
  }
  func.func @transform_8(%arg0: i32) -> (i32, i32, i32) {
    %c0_i32 = arith.constant 0 : i32
    %c0_i32_0 = arith.constant 0 : i32
    %c0_i32_1 = arith.constant 0 : i32
    return %arg0, %c0_i32, %c0_i32_0 : i32, i32, i32
  }
}

</mosaic_0001>

<llo_original>
// kernel: tpu_custom_call.1
$region0: #{tpu_custom_call.1}
  #allocation0 [shape = 'u32[]', space=smem, size = 0x4, offset = 0x4, fixed_abs, tag = 'smem constant byte address 0x4 - core index']
  #allocation1 [shape = 'u32[72,128]{1,0:T(1,128)}', space=vmem, size = 0x9000, scoped, tag = 'internal scratch']
  #allocation2 [shape = 'bf16[4,640]{1,0:T(4,128)(2,1)}', space=vmem, size = 0x1400, scoped, tag = 'scratch operand']
  #allocation3 [shape = 'bf16[36,384]{1,0:T(8,128)(2,1)}', space=vmem, size = 0x7800, scoped, tag = 'scratch operand']
  #allocation4 [shape = 'f32[1,1]{1,0:T(1,128)S(6)}', space=smem, size = 0x200, scoped, tag = 'scoped memory for tpu_custom_call.1']
  %s0 = inlined_call_operand.<no memory space> [shape: f32[1,1], index: 0, kind: input, shape index: {}]
  %s1 = inlined_call_operand.hbm [shape: bf16[2,4,640], index: 1, kind: input, shape index: {}]
  %s2 = inlined_call_operand.hbm [shape: f32[2,4,384], index: 2, kind: input, shape index: {}]
  %s3 = inlined_call_operand.vmem [shape: f32[1,384], index: 3, kind: input, shape index: {}]
  %s4 = inlined_call_operand.vmem [shape: bf16[4,36], index: 4, kind: input, shape index: {}]
  %s5 = inlined_call_operand.vmem [shape: f32[4,1], index: 5, kind: input, shape index: {}]
  %s6 = inlined_call_operand.vmem [shape: bf16[4,36], index: 6, kind: input, shape index: {}]
  %s7 = inlined_call_operand.vmem [shape: f32[4,1], index: 7, kind: input, shape index: {}]
  %s8 = inlined_call_operand.hbm [shape: f32[2,4,384], index: 8, kind: output, shape index: {}]
  %s9 = sld [smem:[#allocation0]]
  $region73: #{tpu_custom_call.1} parent=0
    _
  %s11 = ssub.s32 1, %s9
  %s12 = scalar_select 0, %s11, %s9
  %13 = sst [smem:[#allocation4]] %s0
  $region1: #{tpu_custom_call.1} parent=0
    #allocation5 [shape = 'u8[10240]{0}', space=vmem, size = 0x2800, scoped, tag = 'input window, operand 1']
    #allocation6 [shape = 's32[2]{0}', space=sflag, size = 0x8, scoped, tag = 'scoped memory for tpu_custom_call.1']
    #allocation7 [shape = 's32[2]{0}', space=sflag, size = 0x8, scoped, tag = 'scoped memory for tpu_custom_call.1']
    #allocation8 [shape = 'u8[12288]{0}', space=vmem, size = 0x3000, scoped, tag = 'input window, operand 2']
    #allocation9 [shape = 's32[2]{0}', space=sflag, size = 0x8, scoped, tag = 'scoped memory for tpu_custom_call.1']
    #allocation10 [shape = 'u8[12288]{0}', space=vmem, size = 0x3000, scoped, tag = 'output window, operand 0']
    %14 = vsyncpa [#allocation6], 0
    %s15 = scalar_lea.sflag [#allocation6], 1
    %16 = vsyncpa %s15, 0
    %17 = vsyncpa [#allocation9], 0
    %s18 = scalar_lea.sflag [#allocation9], 1
    %19 = vsyncpa %s18, 0
    %20 = vsyncpa [#allocation7], 0
    %s21 = scalar_lea.sflag [#allocation7], 1
    %22 = vsyncpa %s21, 0
    loop: start=0, step=1, limit=4
    $region2: #{tpu_custom_call.1} parent=1 // loop_pre_header
      _
    $region3: #{tpu_custom_call.1} parent=1 // loop_header
      %s24 = sphi 0, %s28
      %p25 = scmp.ge.s32.totalorder %s24, 4
      %s32 = sphi 0, %s32
      %s34 = sphi 0, %s32
      %s35 = sphi 0, %s34
      %s49 = sphi 0, %s35
      %s55 = sphi 0, %s57
      %s58 = sphi 0, %s55
      %s59 = sphi 0, %s58
      %s75 = sphi 0, %s59
      %s81 = sphi 0, %s83
      %s84 = sphi 0, %s81
      %s85 = sphi 0, %s84
      %s101 = sphi 0, %s85
      %s105 = sphi 0, %s105
      %s107 = sphi 0, %s105
      %s108 = sphi 0, %s107
      %s122 = sphi 0, %s108
      %s126 = sphi 0, %s126
      %s128 = sphi 0, %s126
      %s129 = sphi 0, %s128
      %s143 = sphi 0, %s129
      %s147 = sphi 0, %s147
      %s149 = sphi 0, %s147
      %s150 = sphi 0, %s149
      %s164 = sphi 0, %s150
      %s168 = sphi 0, %s168
      %s170 = sphi 0, %s168
      %s171 = sphi 0, %s170
      %s185 = sphi 0, %s171
      %s189 = sphi 0, %s189
      %s191 = sphi 0, %s189
      %s192 = sphi 0, %s191
      %s206 = sphi 0, %s192
      %s212 = sphi 0, %s214
      %s215 = sphi 0, %s212
      %s216 = sphi 0, %s215
      %s232 = sphi 0, %s216
    $region4: #{tpu_custom_call.1} parent=1 // loop_header_branch
      %27 = sbr.rel (%p25) target = $region8
    $region5: #{tpu_custom_call.1} parent=1 // loop_body
      %s29 = ssub.s32 %s24, 1
      %s30 = ssub.s32 %s24, 2
      %s31 = sadd.s32 %s24, 1
      %s33 = sadd.s32 %s32, 1
      %p36 = scmp.eq.s32.totalorder %s24, 1
      %p37 = scmp.ne.s32.totalorder %s32, %s34
      %p38 = scmp.eq.s32.totalorder %s24, 0
      %p39 = por %p37, %p38
      %p40 = scmp.ne.s32.totalorder %s32, %s34
      %p41 = scmp.eq.s32.totalorder %s29, 1
      %p42 = por %p40, %p41
      %p43 = scmp.ne.s32.totalorder %s34, %s35
      %p44 = scmp.eq.s32.totalorder %s29, 0
      %p45 = por %p43, %p44
      %p46 = scmp.ne.s32.totalorder %s34, %s35
      %p47 = scmp.eq.s32.totalorder %s30, 1
      %p48 = por %p46, %p47
      %p50 = scmp.ne.s32.totalorder %s35, %s49
      %p51 = scmp.eq.s32.totalorder %s30, 0
      %p52 = por %p50, %p51
      %s53 = ssub.s32 %s24, %s31
      %p54 = scmp.eq.s32.totalorder %s53, 0
      %s56 = sadd.s32 %s55, 1
      %s57 = scalar_select %p54, %s55, %s56
      %p60 = pneg %p54
      %p61 = scmp.eq.s32.totalorder %s24, 1
      %p62 = por %p60, %p61
      %p63 = scmp.ne.s32.totalorder %s55, %s58
      %p64 = scmp.eq.s32.totalorder %s24, 0
      %p65 = por %p63, %p64
      %p66 = scmp.ne.s32.totalorder %s55, %s58
      %p67 = scmp.eq.s32.totalorder %s29, 1
      %p68 = por %p66, %p67
      %p69 = scmp.ne.s32.totalorder %s58, %s59
      %p70 = scmp.eq.s32.totalorder %s29, 0
      %p71 = por %p69, %p70
      %p72 = scmp.ne.s32.totalorder %s58, %s59
      %p73 = scmp.eq.s32.totalorder %s30, 1
      %p74 = por %p72, %p73
      %p76 = scmp.ne.s32.totalorder %s59, %s75
      %p77 = scmp.eq.s32.totalorder %s30, 0
      %p78 = por %p76, %p77
      %s79 = ssub.s32 %s24, %s31
      %p80 = scmp.eq.s32.totalorder %s79, 0
      %s82 = sadd.s32 %s81, 1
      %s83 = scalar_select %p80, %s81, %s82
      %p86 = pneg %p80
      %p87 = scmp.eq.s32.totalorder %s24, 1
      %p88 = por %p86, %p87
      %p89 = scmp.ne.s32.totalorder %s81, %s84
      %p90 = scmp.eq.s32.totalorder %s24, 0
      %p91 = por %p89, %p90
      %p92 = scmp.ne.s32.totalorder %s81, %s84
      %p93 = scmp.eq.s32.totalorder %s29, 1
      %p94 = por %p92, %p93
      %p95 = scmp.ne.s32.totalorder %s84, %s85
      %p96 = scmp.eq.s32.totalorder %s29, 0
      %p97 = por %p95, %p96
      %p98 = scmp.ne.s32.totalorder %s84, %s85
      %p99 = scmp.eq.s32.totalorder %s30, 1
      %p100 = por %p98, %p99
      %p102 = scmp.ne.s32.totalorder %s85, %s101
      %p103 = scmp.eq.s32.totalorder %s30, 0
      %p104 = por %p102, %p103
      %s106 = sadd.s32 %s105, 1
      %p109 = scmp.eq.s32.totalorder %s24, 1
      %p110 = scmp.ne.s32.totalorder %s105, %s107
      %p111 = scmp.eq.s32.totalorder %s24, 0
      %p112 = por %p110, %p111
      %p113 = scmp.ne.s32.totalorder %s105, %s107
      %p114 = scmp.eq.s32.totalorder %s29, 1
      %p115 = por %p113, %p114
      %p116 = scmp.ne.s32.totalorder %s107, %s108
      %p117 = scmp.eq.s32.totalorder %s29, 0
      %p118 = por %p116, %p117
      %p119 = scmp.ne.s32.totalorder %s107, %s108
      %p120 = scmp.eq.s32.totalorder %s30, 1
      %p121 = por %p119, %p120
      %p123 = scmp.ne.s32.totalorder %s108, %s122
      %p124 = scmp.eq.s32.totalorder %s30, 0
      %p125 = por %p123, %p124
      %s127 = sadd.s32 %s126, 1
      %p130 = scmp.eq.s32.totalorder %s24, 1
      %p131 = scmp.ne.s32.totalorder %s126, %s128
      %p132 = scmp.eq.s32.totalorder %s24, 0
      %p133 = por %p131, %p132
      %p134 = scmp.ne.s32.totalorder %s126, %s128
      %p135 = scmp.eq.s32.totalorder %s29, 1
      %p136 = por %p134, %p135
      %p137 = scmp.ne.s32.totalorder %s128, %s129
      %p138 = scmp.eq.s32.totalorder %s29, 0
      %p139 = por %p137, %p138
      %p140 = scmp.ne.s32.totalorder %s128, %s129
      %p141 = scmp.eq.s32.totalorder %s30, 1
      %p142 = por %p140, %p141
      %p144 = scmp.ne.s32.totalorder %s129, %s143
      %p145 = scmp.eq.s32.totalorder %s30, 0
      %p146 = por %p144, %p145
      %s148 = sadd.s32 %s147, 1
      %p151 = scmp.eq.s32.totalorder %s24, 1
      %p152 = scmp.ne.s32.totalorder %s147, %s149
      %p153 = scmp.eq.s32.totalorder %s24, 0
      %p154 = por %p152, %p153
      %p155 = scmp.ne.s32.totalorder %s147, %s149
      %p156 = scmp.eq.s32.totalorder %s29, 1
      %p157 = por %p155, %p156
      %p158 = scmp.ne.s32.totalorder %s149, %s150
      %p159 = scmp.eq.s32.totalorder %s29, 0
      %p160 = por %p158, %p159
      %p161 = scmp.ne.s32.totalorder %s149, %s150
      %p162 = scmp.eq.s32.totalorder %s30, 1
      %p163 = por %p161, %p162
      %p165 = scmp.ne.s32.totalorder %s150, %s164
      %p166 = scmp.eq.s32.totalorder %s30, 0
      %p167 = por %p165, %p166
      %s169 = sadd.s32 %s168, 1
      %p172 = scmp.eq.s32.totalorder %s24, 1
      %p173 = scmp.ne.s32.totalorder %s168, %s170
      %p174 = scmp.eq.s32.totalorder %s24, 0
      %p175 = por %p173, %p174
      %p176 = scmp.ne.s32.totalorder %s168, %s170
      %p177 = scmp.eq.s32.totalorder %s29, 1
      %p178 = por %p176, %p177
      %p179 = scmp.ne.s32.totalorder %s170, %s171
      %p180 = scmp.eq.s32.totalorder %s29, 0
      %p181 = por %p179, %p180
      %p182 = scmp.ne.s32.totalorder %s170, %s171
      %p183 = scmp.eq.s32.totalorder %s30, 1
      %p184 = por %p182, %p183
      %p186 = scmp.ne.s32.totalorder %s171, %s185
      %p187 = scmp.eq.s32.totalorder %s30, 0
      %p188 = por %p186, %p187
      %s190 = sadd.s32 %s189, 1
      %p193 = scmp.eq.s32.totalorder %s24, 1
      %p194 = scmp.ne.s32.totalorder %s189, %s191
      %p195 = scmp.eq.s32.totalorder %s24, 0
      %p196 = por %p194, %p195
      %p197 = scmp.ne.s32.totalorder %s189, %s191
      %p198 = scmp.eq.s32.totalorder %s29, 1
      %p199 = por %p197, %p198
      %p200 = scmp.ne.s32.totalorder %s191, %s192
      %p201 = scmp.eq.s32.totalorder %s29, 0
      %p202 = por %p200, %p201
      %p203 = scmp.ne.s32.totalorder %s191, %s192
      %p204 = scmp.eq.s32.totalorder %s30, 1
      %p205 = por %p203, %p204
      %p207 = scmp.ne.s32.totalorder %s192, %s206
      %p208 = scmp.eq.s32.totalorder %s30, 0
      %p209 = por %p207, %p208
      %s210 = ssub.s32 %s24, %s31
      %p211 = scmp.eq.s32.totalorder %s210, 0
      %s213 = sadd.s32 %s212, 1
      %s214 = scalar_select %p211, %s212, %s213
      %p217 = pneg %p211
      %p218 = scmp.eq.s32.totalorder %s24, 1
      %p219 = por %p217, %p218
      %p220 = scmp.ne.s32.totalorder %s212, %s215
      %p221 = scmp.eq.s32.totalorder %s24, 0
      %p222 = por %p220, %p221
      %p223 = scmp.ne.s32.totalorder %s212, %s215
      %p224 = scmp.eq.s32.totalorder %s29, 1
      %p225 = por %p223, %p224
      %p226 = scmp.ne.s32.totalorder %s215, %s216
      %p227 = scmp.eq.s32.totalorder %s29, 0
      %p228 = por %p226, %p227
      %p229 = scmp.ne.s32.totalorder %s215, %s216
      %p230 = scmp.eq.s32.totalorder %s30, 1
      %p231 = por %p229, %p230
      %p233 = scmp.ne.s32.totalorder %s216, %s232
      %p234 = scmp.eq.s32.totalorder %s30, 0
      %p235 = por %p233, %p234
      %p236 = scmp.le.s32.totalorder 1, %s24
      %p237 = scmp.lt.s32.totalorder %s24, 3
      %p238 = pnand %p236, %p237
      %p239 = pneg %p238
      // Predicated region
      $region9: #{tpu_custom_call.1} parent=5 // pred_check
        _
      $region10: #{tpu_custom_call.1} parent=5 // pred_check_branch
        %241 = sbr.rel (%p238) target = $region12
      $region11: #{tpu_custom_call.1} parent=5 // pred_region
        %s242 = ssub.s32 %s24, 1
        // Predicated region
        $region13: #{tpu_custom_call.1} parent=11 // pred_check
          %p243 = pneg %p45
        $region14: #{tpu_custom_call.1} parent=11 // pred_check_branch
          %245 = sbr.rel (%p243) target = $region16
        $region15: #{tpu_custom_call.1} parent=11 // pred_region
          _
        $region16: #{tpu_custom_call.1} parent=11 // pred_fallthru
          _
        // Predicated region
        $region17: #{tpu_custom_call.1} parent=11 // pred_check
          %p246 = pneg %p118
        $region18: #{tpu_custom_call.1} parent=11 // pred_check_branch
          %248 = sbr.rel (%p246) target = $region20
        $region19: #{tpu_custom_call.1} parent=11 // pred_region
          _
        $region20: #{tpu_custom_call.1} parent=11 // pred_fallthru
          _
        // Predicated region
        $region21: #{tpu_custom_call.1} parent=11 // pred_check
          %p249 = pneg %p139
        $region22: #{tpu_custom_call.1} parent=11 // pred_check_branch
          %251 = sbr.rel (%p249) target = $region24
        $region23: #{tpu_custom_call.1} parent=11 // pred_region
          _
        $region24: #{tpu_custom_call.1} parent=11 // pred_fallthru
          _
        // Predicated region
        $region25: #{tpu_custom_call.1} parent=11 // pred_check
          %p252 = pneg %p160
        $region26: #{tpu_custom_call.1} parent=11 // pred_check_branch
          %254 = sbr.rel (%p252) target = $region28
        $region27: #{tpu_custom_call.1} parent=11 // pred_region
          _
        $region28: #{tpu_custom_call.1} parent=11 // pred_fallthru
          _
        // Predicated region
        $region29: #{tpu_custom_call.1} parent=11 // pred_check
          %p255 = pneg %p181
        $region30: #{tpu_custom_call.1} parent=11 // pred_check_branch
          %257 = sbr.rel (%p255) target = $region32
        $region31: #{tpu_custom_call.1} parent=11 // pred_region
          _
        $region32: #{tpu_custom_call.1} parent=11 // pred_fallthru
          _
        // Predicated region
        $region33: #{tpu_custom_call.1} parent=11 // pred_check
          %p258 = pneg %p202
        $region34: #{tpu_custom_call.1} parent=11 // pred_check_branch
          %260 = sbr.rel (%p258) target = $region36
        $region35: #{tpu_custom_call.1} parent=11 // pred_region
          _
        $region36: #{tpu_custom_call.1} parent=11 // pred_fallthru
          _
      $region12: #{tpu_custom_call.1} parent=5 // pred_fallthru
        _
      %p261 = scmp.lt.s32.totalorder %s24, 2
      // Predicated region
      $region37: #{tpu_custom_call.1} parent=5 // pred_check
        %p262 = pneg %p261
      $region38: #{tpu_custom_call.1} parent=5 // pred_check_branch
        %264 = sbr.rel (%p262) target = $region40
      $region39: #{tpu_custom_call.1} parent=5 // pred_region
        // Predicated region
        $region41: #{tpu_custom_call.1} parent=39 // pred_check
          %p265 = pneg %p65
        $region42: #{tpu_custom_call.1} parent=39 // pred_check_branch
          %267 = sbr.rel (%p265) target = $region44
        $region43: #{tpu_custom_call.1} parent=39 // pred_region
          %s268 = sand.u32 %s55, 1
          %s269 = scalar_lea.sflag [#allocation6], %s268
          %s270 = sand.u32 %s55, 1
          %s271 = smul.addr %s270, 10
          %s272 = scalar_lea.vmem [#allocation5], %s271
          %274 = vsyncadd %s269, 0
          %s275 = smul.addr %s24, 5
          %s276 = smul.addr %s275, 2
          %s277 = scalar_lea.hbm %s1, %s276
          %s279 = sshll.u32 %s277, 4
          %s280 = int_to_ptr.hbm [resolvable:$true] %s279
          %s281 = sshll.u32 %s272, 4
          %s282 = int_to_ptr.vmem [resolvable:$true] %s281
          %284 = dma.hbm_to_vmem [thread:$0]  %s280, 160, %s282, %s269
        $region44: #{tpu_custom_call.1} parent=39 // pred_fallthru
          _
        // Predicated region
        $region45: #{tpu_custom_call.1} parent=39 // pred_check
          %p285 = pneg %p91
        $region46: #{tpu_custom_call.1} parent=39 // pred_check_branch
          %287 = sbr.rel (%p285) target = $region48
        $region47: #{tpu_custom_call.1} parent=39 // pred_region
          %s288 = sand.u32 %s81, 1
          %s289 = scalar_lea.sflag [#allocation9], %s288
          %s290 = sand.u32 %s81, 1
          %s291 = smul.addr %s290, 12
          %s292 = scalar_lea.vmem [#allocation8], %s291
          %294 = vsyncadd %s289, 0
          %s295 = smul.addr %s24, 3
          %s296 = smul.addr %s295, 4
          %s297 = scalar_lea.hbm %s2, %s296
          %s299 = sshll.u32 %s297, 4
          %s300 = int_to_ptr.hbm [resolvable:$true] %s299
          %s301 = sshll.u32 %s292, 4
          %s302 = int_to_ptr.vmem [resolvable:$true] %s301
          %304 = dma.hbm_to_vmem [thread:$0]  %s300, 192, %s302, %s289
        $region48: #{tpu_custom_call.1} parent=39 // pred_fallthru
          _
      $region40: #{tpu_custom_call.1} parent=5 // pred_fallthru
        _
      %p305 = scmp.le.s32.totalorder 1, %s24
      %p306 = scmp.lt.s32.totalorder %s24, 3
      %p307 = pnand %p305, %p306
      %p308 = pneg %p307
      // Predicated region
      $region49: #{tpu_custom_call.1} parent=5 // pred_check
        _
      $region50: #{tpu_custom_call.1} parent=5 // pred_check_branch
        %310 = sbr.rel (%p307) target = $region52
      $region51: #{tpu_custom_call.1} parent=5 // pred_region
        %s311 = ssub.s32 %s24, 1
        %s312 = sand.u32 %s58, 1
        %s313 = scalar_lea.sflag [#allocation6], %s312
        %s314 = sand.u32 %s58, 1
        %s315 = smul.addr %s314, 10
        %s316 = scalar_lea.vmem [#allocation5], %s315
        // Predicated region
        $region53: #{tpu_custom_call.1} parent=51 // pred_check
          %p317 = pneg %p71
        $region54: #{tpu_custom_call.1} parent=51 // pred_check_branch
          %319 = sbr.rel (%p317) target = $region56
        $region55: #{tpu_custom_call.1} parent=51 // pred_region
          %321 = dma.done %s313, 160
        $region56: #{tpu_custom_call.1} parent=51 // pred_fallthru
          _
        %s322 = sand.u32 %s84, 1
        %s323 = scalar_lea.sflag [#allocation9], %s322
        %s324 = sand.u32 %s84, 1
        %s325 = smul.addr %s324, 12
        %s326 = scalar_lea.vmem [#allocation8], %s325
        // Predicated region
        $region57: #{tpu_custom_call.1} parent=51 // pred_check
          %p327 = pneg %p97
        $region58: #{tpu_custom_call.1} parent=51 // pred_check_branch
          %329 = sbr.rel (%p327) target = $region60
        $region59: #{tpu_custom_call.1} parent=51 // pred_region
          %331 = dma.done %s323, 192
        $region60: #{tpu_custom_call.1} parent=51 // pred_fallthru
          _
        %p332 = pneg %p45
        %p333 = pneg %p42
        %s334 = sand.u32 %s58, 1
        %s335 = scalar_lea.sflag [#allocation6], %s334
        %s336 = sand.u32 %s58, 1
        %s337 = smul.addr %s336, 10
        %s338 = scalar_lea.vmem [#allocation5], %s337
        %p339 = pneg %p71
        %p340 = pneg %p68
        %s341 = sand.u32 %s84, 1
        %s342 = scalar_lea.sflag [#allocation9], %s341
        %s343 = sand.u32 %s84, 1
        %s344 = smul.addr %s343, 12
        %s345 = scalar_lea.vmem [#allocation8], %s344
        %p346 = pneg %p97
        %p347 = pneg %p94
        %p348 = pneg %p118
        %p349 = pneg %p115
        %p350 = pneg %p139
        %p351 = pneg %p136
        %p352 = pneg %p160
        %p353 = pneg %p157
        %p354 = pneg %p181
        %p355 = pneg %p178
        %p356 = pneg %p202
        %p357 = pneg %p199
        %p358 = pneg %p228
        %p359 = pneg %p225
        %s360 = sand.u32 %s215, 1
        %s361 = scalar_lea.sflag [#allocation7], %s360
        %s362 = sand.u32 %s215, 1
        %s363 = smul.addr %s362, 12
        %s364 = scalar_lea.vmem [#allocation10], %s363
        %366 = vst [vmem:[#allocation2] sm:$0x3] 0
        %367 = vst [vmem:[#allocation2 + $0x8] sm:$0x3] 0
        %s368 = sld [smem:[#allocation4]]
        %v369 = vld [vmem:[%s3] sm:$0x7]
        %v370 = vld [vmem:[%s4] sm:$0x3]
        %v371 = vld [vmem:[%s6] sm:$0x3]
        %v372 = vld [vmem:[%s5] sm:$0xf]
        %v373 = vld [vmem:[%s7] sm:$0xf]
        %v374 = vld [vmem:[%s316] sm:$0xff]
        %376 = vst [vmem:[#allocation1] ss:$2 sm:$0xff] %v374
        %v377 = vld.sshfl [vmem:[#allocation1] sm:$0xff pattern:$0x75643120]
        %v379 = vld.sshfl [vmem:[#allocation1 + $0x8] sm:$0xff pattern:$0x75643120]
        %381 = vrot.lane.b32.xlu0 %v377, 19
        %v382 = vpop.permute.xlu0 %381
        %383 = vrot.lane.b32.xlu0 %v379, 19
        %v384 = vpop.permute.xlu0 %383
        %v385 = vrot.slane %v382, 4
        %v386 = vrot.slane %v384, 4
        %vm387 = vcmask 1043456
        %v388 = vsel %vm387, %v385, %v386
        %vm389 = vcmask 154624
        %v390 = vsel %vm389, %v382, %v388
        %v391 = vsel %vm389, %v384, %v386
        %394 = vst [vmem:[#allocation3] sm:$0x33] %v390
        %395 = vst [vmem:[#allocation3 + $0x8] sm:$0x3] %v391
        %v396 = vld [vmem:[%s316] sm:$0xff]
        %s398 = scalar_lea.vmem [#allocation1], 1
        %399 = vst [vmem:[%s398] ss:$2 sm:$0xff] %v396
        %v400 = vld.sshfl [vmem:[#allocation1] sm:$0xff pattern:$0x75643120]
        %v402 = vld.sshfl [vmem:[#allocation1 + $0x8] sm:$0xff pattern:$0x75643120]
        %404 = vrot.lane.b32.xlu0 %v400, 18
        %v405 = vpop.permute.xlu0 %404
        %406 = vrot.lane.b32.xlu0 %v402, 18
        %v407 = vpop.permute.xlu0 %406
        %v408 = vrot.slane %v405, 4
        %v409 = vrot.slane %v407, 4
        %v410 = vsel %vm387, %v408, %v409
        %vm411 = vcmask 146432
        %v412 = vsel %vm411, %v405, %v410
        %v413 = vsel %vm411, %v407, %v409
        %416 = vst [vmem:[#allocation3] sm:$0xcc] %v412
        %417 = vst [vmem:[#allocation3 + $0x8] sm:$0xc] %v413
        %v418 = vld [vmem:[%s316] sm:$0xff]
        %420 = vst [vmem:[#allocation1] ss:$2 sm:$0xff] %v418
        %v421 = vld.sshfl [vmem:[#allocation1] sm:$0xff pattern:$0x75643120]
        %v423 = vld.sshfl [vmem:[#allocation1 + $0x8] sm:$0xff pattern:$0x75643120]
        %425 = vrot.lane.b32.xlu0 %v421, 17
        %v426 = vpop.permute.xlu0 %425
        %427 = vrot.lane.b32.xlu0 %v423, 17
        %v428 = vpop.permute.xlu0 %427
        %v429 = vrot.slane %v426, 4
        %v430 = vrot.slane %v428, 4
        %v431 = vsel %vm387, %v429, %v430
        %vm432 = vcmask 138240
        %v433 = vsel %vm432, %v426, %v431
        %v434 = vsel %vm432, %v428, %v430
        %437 = vst [vmem:[#allocation3 + $0xc] sm:$0x33] %v433
        %438 = vst [vmem:[#allocation3 + $0x14] sm:$0x3] %v434
        %v439 = vld [vmem:[%s316] sm:$0xff]
        %s441 = scalar_lea.vmem [#allocation1], 1
        %442 = vst [vmem:[%s441] ss:$2 sm:$0xff] %v439
        %v443 = vld.sshfl [vmem:[#allocation1] sm:$0xff pattern:$0x75643120]
        %v445 = vld.sshfl [vmem:[#allocation1 + $0x8] sm:$0xff pattern:$0x75643120]
        %447 = vrot.lane.b32.xlu0 %v443, 1
        %v448 = vpop.permute.xlu0 %447
        %449 = vrot.lane.b32.xlu0 %v445, 1
        %v450 = vpop.permute.xlu0 %449
        %v451 = vrot.slane %v448, 4
        %v452 = vrot.slane %v450, 4
        %v453 = vsel %vm387, %v451, %v452
        %vm454 = vcmask 7168
        %v455 = vsel %vm454, %v448, %v453
        %v456 = vsel %vm454, %v450, %v452
        %459 = vst [vmem:[#allocation3 + $0xc] sm:$0xcc] %v455
        %460 = vst [vmem:[#allocation3 + $0x14] sm:$0xc] %v456
        %v461 = vld [vmem:[%s316 + $0x2] sm:$0x3f]
        %463 = vst [vmem:[#allocation1] ss:$2 sm:$0xff] %v461
        %v464 = vld.sshfl [vmem:[#allocation1] sm:$0xff pattern:$0x75643120]
        %v465 = vld.sshfl [vmem:[#allocation1 + $0x8] sm:$0xff pattern:$0x75643120]
        %468 = vst [vmem:[#allocation3 + $0x18] sm:$0x33] %v464
        %469 = vst [vmem:[#allocation3 + $0x20] sm:$0x3] %v465
        %v470 = vld [vmem:[%s316 + $0x2] sm:$0xff]
        %s472 = scalar_lea.vmem [#allocation1], 1
        %473 = vst [vmem:[%s472] ss:$2 sm:$0xff] %v470
        %v474 = vld.sshfl [vmem:[#allocation1] sm:$0xff pattern:$0x75643120]
        %v476 = vld.sshfl [vmem:[#allocation1 + $0x8] sm:$0xff pattern:$0x75643120]
        %478 = vrot.lane.b32.xlu0 %v474, 127
        %v479 = vpop.permute.xlu0 %478
        %480 = vrot.lane.b32.xlu0 %v476, 127
        %v481 = vpop.permute.xlu0 %480
        %v482 = vrot.slane %v479, 4
        %v483 = vrot.slane %v481, 4
        %v484 = vsel %vm387, %v482, %v483
        %vm485 = vcmask 1039360
        %v486 = vsel %vm485, %v479, %v484
        %v487 = vsel %vm485, %v481, %v483
        %490 = vst [vmem:[#allocation3 + $0x18] sm:$0xcc] %v486
        %491 = vst [vmem:[#allocation3 + $0x20] sm:$0xc] %v487
        %v492 = vld [vmem:[%s316 + $0x2] sm:$0xff]
        %494 = vst [vmem:[#allocation1] ss:$2 sm:$0xff] %v492
        %v495 = vld.sshfl [vmem:[#allocation1] sm:$0xff pattern:$0x75643120]
        %v497 = vld.sshfl [vmem:[#allocation1 + $0x8] sm:$0xff pattern:$0x75643120]
        %499 = vrot.lane.b32.xlu0 %v495, 111
        %v500 = vpop.permute.xlu0 %499
        %501 = vrot.lane.b32.xlu0 %v497, 111
        %v502 = vpop.permute.xlu0 %501
        %v503 = vrot.slane %v500, 4
        %v504 = vrot.slane %v502, 4
        %v505 = vsel %vm387, %v503, %v504
        %vm506 = vcmask 908288
        %v507 = vsel %vm506, %v500, %v505
        %v508 = vsel %vm506, %v502, %v504
        %511 = vst [vmem:[#allocation3 + $0x24] sm:$0x33] %v507
        %512 = vst [vmem:[#allocation3 + $0x2c] sm:$0x3] %v508
        %v513 = vld [vmem:[%s316 + $0x2] sm:$0xff]
        %s515 = scalar_lea.vmem [#allocation1], 1
        %516 = vst [vmem:[%s515] ss:$2 sm:$0xff] %v513
        %v517 = vld.sshfl [vmem:[#allocation1] sm:$0xff pattern:$0x75643120]
        %v519 = vld.sshfl [vmem:[#allocation1 + $0x8] sm:$0xff pattern:$0x75643120]
        %521 = vrot.lane.b32.xlu0 %v517, 110
        %v522 = vpop.permute.xlu0 %521
        %523 = vrot.lane.b32.xlu0 %v519, 110
        %v524 = vpop.permute.xlu0 %523
        %v525 = vrot.slane %v522, 4
        %v526 = vrot.slane %v524, 4
        %v527 = vsel %vm387, %v525, %v526
        %vm528 = vcmask 900096
        %v529 = vsel %vm528, %v522, %v527
        %v530 = vsel %vm528, %v524, %v526
        %533 = vst [vmem:[#allocation3 + $0x24] sm:$0xcc] %v529
        %534 = vst [vmem:[#allocation3 + $0x2c] sm:$0xc] %v530
        %v535 = vld [vmem:[%s316 + $0x2] sm:$0xff]
        %537 = vst [vmem:[#allocation1] ss:$2 sm:$0xff] %v535
        %v538 = vld.sshfl [vmem:[#allocation1] sm:$0xff pattern:$0x75643120]
        %v540 = vld.sshfl [vmem:[#allocation1 + $0x8] sm:$0xff pattern:$0x75643120]
        %542 = vrot.lane.b32.xlu0 %v538, 109
        %v543 = vpop.permute.xlu0 %542
        %544 = vrot.lane.b32.xlu0 %v540, 109
        %v545 = vpop.permute.xlu0 %544
        %v546 = vrot.slane %v543, 4
        %v547 = vrot.slane %v545, 4
        %v548 = vsel %vm387, %v546, %v547
        %vm549 = vcmask 891904
        %v550 = vsel %vm549, %v543, %v548
        %v551 = vsel %vm549, %v545, %v547
        %554 = vst [vmem:[#allocation3 + $0x30] sm:$0x33] %v550
        %555 = vst [vmem:[#allocation3 + $0x38] sm:$0x3] %v551
        %v556 = vld [vmem:[#allocation3] sm:$0xff]
        %v557 = vld [vmem:[#allocation3 + $0x8] sm:$0xf]
        %v558 = vld [vmem:[#allocation3 + $0xc] sm:$0xff]
        %v559 = vld [vmem:[#allocation3 + $0x14] sm:$0xf]
        %v560 = vld [vmem:[#allocation3 + $0x18] sm:$0xff]
        %v561 = vld [vmem:[#allocation3 + $0x20] sm:$0xf]
        %v562 = vld [vmem:[#allocation3 + $0x24] sm:$0xff]
        %v563 = vld [vmem:[#allocation3 + $0x2c] sm:$0xf]
        %v564 = vld [vmem:[#allocation3 + $0x30] sm:$0x33]
        %v565 = vld [vmem:[#allocation3 + $0x38] sm:$0x3]
        %567 = vset.pattern.permute.xlu0 0
        %568 = vperm.xlu0 %567, %v372
        %v569 = vpop.permute.xlu0 %568
        %v581 = vunpack.c.l.b16 %v556
        %v582 = vunpack.c.h.b16 %v556
        %v583 = vunpack.c.l.b16 %v557
        %v584 = vunpack.c.l.b16 %v558
        %v585 = vunpack.c.h.b16 %v558
        %v586 = vunpack.c.l.b16 %v559
        %v587 = vunpack.c.l.b16 %v560
        %v588 = vunpack.c.h.b16 %v560
        %v589 = vunpack.c.l.b16 %v561
        %v590 = vunpack.c.l.b16 %v562
        %v591 = vunpack.c.h.b16 %v562
        %v592 = vunpack.c.l.b16 %v563
        %v593 = vunpack.c.l.b16 %v564
        %v594 = vunpack.c.h.b16 %v564
        %v595 = vunpack.c.l.b16 %v565
        %v596 = vpack.c.b16 %v584, %v581
        %v597 = vpack.c.b16 %v585, %v582
        %v598 = vpack.c.b16 %v586, %v583
        %v599 = vpack.c.b16 %v590, %v587
        %v600 = vpack.c.b16 %v591, %v588
        %v601 = vpack.c.b16 %v592, %v589
        %v602 = vpack.c.b16 %v593, %v593
        %v603 = vpack.c.b16 %v594, %v594
        %v604 = vpack.c.b16 %v595, %v595
        %vm611 = vcmask 293888
        %v613 = vsel %vm611, %v370, 0
        %vm615 = vcmask 1041408
        %v617 = vsel %vm615, %v602, 0
        %v620 = vsel %vm615, %v603, 0
        %v623 = vsel %vm615, %v604, 0
        %625 = vmatpush.bf16.msra.mxu0 0
        %626 = vmatpush.bf16.msra.mxu0 0
        %627 = vmatpush.bf16.msra.mxu0 0
        %628 = vmatpush.bf16.msra.mxu0 0
        %629 = vmatpush.bf16.msra.mxu0 0
        %630 = vmatpush.bf16.msra.mxu0 %v617
        %631 = vmatpush.bf16.msra.mxu0 %v599
        %632 = vmatpush.bf16.msra.mxu0 %v596
        %633 = vmatmul.bf16.gmra.mxu0 %v613
        %v634 = vpop.f32.mrf.mxu0
        %v635 = vadd.f32 %v569, %v634
        %v636 = vpop.f32.mrf.mxu0
        %637 = vdwg.mxu0
        %638 = vmatpush.bf16.msra.mxu0 0
        %639 = vmatpush.bf16.msra.mxu0 0
        %640 = vmatpush.bf16.msra.mxu0 0
        %641 = vmatpush.bf16.msra.mxu0 0
        %642 = vmatpush.bf16.msra.mxu0 0
        %643 = vmatpush.bf16.msra.mxu0 %v620
        %644 = vmatpush.bf16.msra.mxu0 %v600
        %645 = vmatpush.bf16.msra.mxu0 %v597
        %646 = vmatmul.bf16.gmra.mxu0 %v613
        %v647 = vpop.f32.mrf.mxu0
        %v648 = vadd.f32 %v569, %v647
        %v649 = vpop.f32.mrf.mxu0
        %650 = vdwg.mxu0
        %651 = vmatpush.bf16.msra.mxu0 0
        %652 = vmatpush.bf16.msra.mxu0 0
        %653 = vmatpush.bf16.msra.mxu0 0
        %654 = vmatpush.bf16.msra.mxu0 0
        %655 = vmatpush.bf16.msra.mxu0 0
        %656 = vmatpush.bf16.msra.mxu0 %v623
        %657 = vmatpush.bf16.msra.mxu0 %v601
        %658 = vmatpush.bf16.msra.mxu0 %v598
        %659 = vmatmul.bf16.gmra.mxu0 %v613
        %v660 = vpop.f32.mrf.mxu0
        %v661 = vadd.f32 %v569, %v660
        %v662 = vpop.f32.mrf.mxu0
        %663 = vdwg.mxu0
        %v664 = vmax.f32 %v635, 0.0
        %v665 = vmax.f32 %v648, 0.0
        %v666 = vmax.f32 %v661, 0.0
        %v668 = vperm.slane %v369, 0
        %v669 = vperm.slane %v369, 1
        %v670 = vperm.slane %v369, 2
        %v674 = vmul.f32 %v664, %v668
        %v675 = vmul.f32 %v665, %v669
        %v676 = vmul.f32 %v666, %v670
        %v677 = vpack.c.bf16 %v675, %v674
        %v678 = vpack.c.bf16 %v676, %v676
        %v681 = vrot.slane %v677, 2
        %v682 = vrot.slane %v678, 4
        %v683 = vrot.slane %v678, 6
        %v686 = vsel %vm615, %v677, %v681
        %vm687 = vcmask 1045508
        %v690 = vsel %vm687, %v682, %v683
        %vm691 = vcmask 1043456
        %v692 = vsel %vm691, %v686, %v690
        %694 = vst [vmem:[#allocation2 + $0x2] sm:$0x3f] %v692
        %v695 = vld [vmem:[#allocation2] sm:$0xff]
        %697 = vst [vmem:[#allocation1] ss:$2 sm:$0xff] %v695
        %v698 = vld.sshfl [vmem:[#allocation1] sm:$0xff pattern:$0x75643120]
        %v700 = vld.sshfl [vmem:[#allocation1 + $0x8] sm:$0xff pattern:$0x75643120]
        %702 = vrot.lane.b32.xlu0 %v698, 19
        %v703 = vpop.permute.xlu0 %702
        %704 = vrot.lane.b32.xlu0 %v700, 19
        %v705 = vpop.permute.xlu0 %704
        %v706 = vrot.slane %v703, 4
        %v707 = vrot.slane %v705, 4
        %v708 = vsel %vm387, %v706, %v707
        %v709 = vsel %vm389, %v703, %v708
        %v710 = vsel %vm389, %v705, %v707
        %713 = vst [vmem:[#allocation3] sm:$0x33] %v709
        %714 = vst [vmem:[#allocation3 + $0x8] sm:$0x3] %v710
        %v715 = vld [vmem:[#allocation2] sm:$0xff]
        %s717 = scalar_lea.vmem [#allocation1], 1
        %718 = vst [vmem:[%s717] ss:$2 sm:$0xff] %v715
        %v719 = vld.sshfl [vmem:[#allocation1] sm:$0xff pattern:$0x75643120]
        %v721 = vld.sshfl [vmem:[#allocation1 + $0x8] sm:$0xff pattern:$0x75643120]
        %723 = vrot.lane.b32.xlu0 %v719, 18
        %v724 = vpop.permute.xlu0 %723
        %725 = vrot.lane.b32.xlu0 %v721, 18
        %v726 = vpop.permute.xlu0 %725
        %v727 = vrot.slane %v724, 4
        %v728 = vrot.slane %v726, 4
        %v729 = vsel %vm387, %v727, %v728
        %v730 = vsel %vm411, %v724, %v729
        %v731 = vsel %vm411, %v726, %v728
        %734 = vst [vmem:[#allocation3] sm:$0xcc] %v730
        %735 = vst [vmem:[#allocation3 + $0x8] sm:$0xc] %v731
        %v736 = vld [vmem:[#allocation2] sm:$0xff]
        %738 = vst [vmem:[#allocation1] ss:$2 sm:$0xff] %v736
        %v739 = vld.sshfl [vmem:[#allocation1] sm:$0xff pattern:$0x75643120]
        %v741 = vld.sshfl [vmem:[#allocation1 + $0x8] sm:$0xff pattern:$0x75643120]
        %743 = vrot.lane.b32.xlu0 %v739, 17
        %v744 = vpop.permute.xlu0 %743
        %745 = vrot.lane.b32.xlu0 %v741, 17
        %v746 = vpop.permute.xlu0 %745
        %v747 = vrot.slane %v744, 4
        %v748 = vrot.slane %v746, 4
        %v749 = vsel %vm387, %v747, %v748
        %v750 = vsel %vm432, %v744, %v749
        %v751 = vsel %vm432, %v746, %v748
        %754 = vst [vmem:[#allocation3 + $0xc] sm:$0x33] %v750
        %755 = vst [vmem:[#allocation3 + $0x14] sm:$0x3] %v751
        %v756 = vld [vmem:[#allocation2] sm:$0xff]
        %s758 = scalar_lea.vmem [#allocation1], 1
        %759 = vst [vmem:[%s758] ss:$2 sm:$0xff] %v756
        %v760 = vld.sshfl [vmem:[#allocation1] sm:$0xff pattern:$0x75643120]
        %v762 = vld.sshfl [vmem:[#allocation1 + $0x8] sm:$0xff pattern:$0x75643120]
        %764 = vrot.lane.b32.xlu0 %v760, 1
        %v765 = vpop.permute.xlu0 %764
        %766 = vrot.lane.b32.xlu0 %v762, 1
        %v767 = vpop.permute.xlu0 %766
        %v768 = vrot.slane %v765, 4
        %v769 = vrot.slane %v767, 4
        %v770 = vsel %vm387, %v768, %v769
        %v771 = vsel %vm454, %v765, %v770
        %v772 = vsel %vm454, %v767, %v769
        %775 = vst [vmem:[#allocation3 + $0xc] sm:$0xcc] %v771
        %776 = vst [vmem:[#allocation3 + $0x14] sm:$0xc] %v772
        %v777 = vld [vmem:[#allocation2 + $0x2] sm:$0x3f]
        %779 = vst [vmem:[#allocation1] ss:$2 sm:$0xff] %v777
        %v780 = vld.sshfl [vmem:[#allocation1] sm:$0xff pattern:$0x75643120]
        %v781 = vld.sshfl [vmem:[#allocation1 + $0x8] sm:$0xff pattern:$0x75643120]
        %784 = vst [vmem:[#allocation3 + $0x18] sm:$0x33] %v780
        %785 = vst [vmem:[#allocation3 + $0x20] sm:$0x3] %v781
        %v786 = vld [vmem:[#allocation2 + $0x2] sm:$0xff]
        %s788 = scalar_lea.vmem [#allocation1], 1
        %789 = vst [vmem:[%s788] ss:$2 sm:$0xff] %v786
        %v790 = vld.sshfl [vmem:[#allocation1] sm:$0xff pattern:$0x75643120]
        %v792 = vld.sshfl [vmem:[#allocation1 + $0x8] sm:$0xff pattern:$0x75643120]
        %794 = vrot.lane.b32.xlu0 %v790, 127
        %v795 = vpop.permute.xlu0 %794
        %796 = vrot.lane.b32.xlu0 %v792, 127
        %v797 = vpop.permute.xlu0 %796
        %v798 = vrot.slane %v795, 4
        %v799 = vrot.slane %v797, 4
        %v800 = vsel %vm387, %v798, %v799
        %v801 = vsel %vm485, %v795, %v800
        %v802 = vsel %vm485, %v797, %v799
        %805 = vst [vmem:[#allocation3 + $0x18] sm:$0xcc] %v801
        %806 = vst [vmem:[#allocation3 + $0x20] sm:$0xc] %v802
        %v807 = vld [vmem:[#allocation2 + $0x2] sm:$0xff]
        %809 = vst [vmem:[#allocation1] ss:$2 sm:$0xff] %v807
        %v810 = vld.sshfl [vmem:[#allocation1] sm:$0xff pattern:$0x75643120]
        %v812 = vld.sshfl [vmem:[#allocation1 + $0x8] sm:$0xff pattern:$0x75643120]
        %814 = vrot.lane.b32.xlu0 %v810, 111
        %v815 = vpop.permute.xlu0 %814
        %816 = vrot.lane.b32.xlu0 %v812, 111
        %v817 = vpop.permute.xlu0 %816
        %v818 = vrot.slane %v815, 4
        %v819 = vrot.slane %v817, 4
        %v820 = vsel %vm387, %v818, %v819
        %v821 = vsel %vm506, %v815, %v820
        %v822 = vsel %vm506, %v817, %v819
        %825 = vst [vmem:[#allocation3 + $0x24] sm:$0x33] %v821
        %826 = vst [vmem:[#allocation3 + $0x2c] sm:$0x3] %v822
        %v827 = vld [vmem:[#allocation2 + $0x2] sm:$0xff]
        %s829 = scalar_lea.vmem [#allocation1], 1
        %830 = vst [vmem:[%s829] ss:$2 sm:$0xff] %v827
        %v831 = vld.sshfl [vmem:[#allocation1] sm:$0xff pattern:$0x75643120]
        %v833 = vld.sshfl [vmem:[#allocation1 + $0x8] sm:$0xff pattern:$0x75643120]
        %835 = vrot.lane.b32.xlu0 %v831, 110
        %v836 = vpop.permute.xlu0 %835
        %837 = vrot.lane.b32.xlu0 %v833, 110
        %v838 = vpop.permute.xlu0 %837
        %v839 = vrot.slane %v836, 4
        %v840 = vrot.slane %v838, 4
        %v841 = vsel %vm387, %v839, %v840
        %v842 = vsel %vm528, %v836, %v841
        %v843 = vsel %vm528, %v838, %v840
        %846 = vst [vmem:[#allocation3 + $0x24] sm:$0xcc] %v842
        %847 = vst [vmem:[#allocation3 + $0x2c] sm:$0xc] %v843
        %v848 = vld [vmem:[#allocation2 + $0x2] sm:$0xff]
        %850 = vst [vmem:[#allocation1] ss:$2 sm:$0xff] %v848
        %v851 = vld.sshfl [vmem:[#allocation1] sm:$0xff pattern:$0x75643120]
        %v853 = vld.sshfl [vmem:[#allocation1 + $0x8] sm:$0xff pattern:$0x75643120]
        %855 = vrot.lane.b32.xlu0 %v851, 109
        %v856 = vpop.permute.xlu0 %855
        %857 = vrot.lane.b32.xlu0 %v853, 109
        %v858 = vpop.permute.xlu0 %857
        %v859 = vrot.slane %v856, 4
        %v860 = vrot.slane %v858, 4
        %v861 = vsel %vm387, %v859, %v860
        %v862 = vsel %vm549, %v856, %v861
        %v863 = vsel %vm549, %v858, %v860
        %866 = vst [vmem:[#allocation3 + $0x30] sm:$0x33] %v862
        %867 = vst [vmem:[#allocation3 + $0x38] sm:$0x3] %v863
        %v868 = vld [vmem:[#allocation3] sm:$0xff]
        %v869 = vld [vmem:[#allocation3 + $0x8] sm:$0xf]
        %v870 = vld [vmem:[#allocation3 + $0xc] sm:$0xff]
        %v871 = vld [vmem:[#allocation3 + $0x14] sm:$0xf]
        %v872 = vld [vmem:[#allocation3 + $0x18] sm:$0xff]
        %v873 = vld [vmem:[#allocation3 + $0x20] sm:$0xf]
        %v874 = vld [vmem:[#allocation3 + $0x24] sm:$0xff]
        %v875 = vld [vmem:[#allocation3 + $0x2c] sm:$0xf]
        %v876 = vld [vmem:[#allocation3 + $0x30] sm:$0x33]
        %v877 = vld [vmem:[#allocation3 + $0x38] sm:$0x3]
        %879 = vset.pattern.permute.xlu0 0
        %880 = vperm.xlu0 %879, %v373
        %v881 = vpop.permute.xlu0 %880
        %v893 = vunpack.c.l.b16 %v868
        %v894 = vunpack.c.h.b16 %v868
        %v895 = vunpack.c.l.b16 %v869
        %v896 = vunpack.c.l.b16 %v870
        %v897 = vunpack.c.h.b16 %v870
        %v898 = vunpack.c.l.b16 %v871
        %v899 = vunpack.c.l.b16 %v872
        %v900 = vunpack.c.h.b16 %v872
        %v901 = vunpack.c.l.b16 %v873
        %v902 = vunpack.c.l.b16 %v874
        %v903 = vunpack.c.h.b16 %v874
        %v904 = vunpack.c.l.b16 %v875
        %v905 = vunpack.c.l.b16 %v876
        %v906 = vunpack.c.h.b16 %v876
        %v907 = vunpack.c.l.b16 %v877
        %v908 = vpack.c.b16 %v896, %v893
        %v909 = vpack.c.b16 %v897, %v894
        %v910 = vpack.c.b16 %v898, %v895
        %v911 = vpack.c.b16 %v902, %v899
        %v912 = vpack.c.b16 %v903, %v900
        %v913 = vpack.c.b16 %v904, %v901
        %v914 = vpack.c.b16 %v905, %v905
        %v915 = vpack.c.b16 %v906, %v906
        %v916 = vpack.c.b16 %v907, %v907
        %v924 = vsel %vm611, %v371, 0
        %v927 = vsel %vm615, %v914, 0
        %v930 = vsel %vm615, %v915, 0
        %v933 = vsel %vm615, %v916, 0
        %935 = vmatpush.bf16.msra.mxu0 0
        %936 = vmatpush.bf16.msra.mxu0 0
        %937 = vmatpush.bf16.msra.mxu0 0
        %938 = vmatpush.bf16.msra.mxu0 0
        %939 = vmatpush.bf16.msra.mxu0 0
        %940 = vmatpush.bf16.msra.mxu0 %v927
        %941 = vmatpush.bf16.msra.mxu0 %v911
        %942 = vmatpush.bf16.msra.mxu0 %v908
        %943 = vmatmul.bf16.gmra.mxu0 %v924
        %v944 = vpop.f32.mrf.mxu0
        %v945 = vadd.f32 %v881, %v944
        %v946 = vpop.f32.mrf.mxu0
        %947 = vdwg.mxu0
        %948 = vmatpush.bf16.msra.mxu0 0
        %949 = vmatpush.bf16.msra.mxu0 0
        %950 = vmatpush.bf16.msra.mxu0 0
        %951 = vmatpush.bf16.msra.mxu0 0
        %952 = vmatpush.bf16.msra.mxu0 0
        %953 = vmatpush.bf16.msra.mxu0 %v930
        %954 = vmatpush.bf16.msra.mxu0 %v912
        %955 = vmatpush.bf16.msra.mxu0 %v909
        %956 = vmatmul.bf16.gmra.mxu0 %v924
        %v957 = vpop.f32.mrf.mxu0
        %v958 = vadd.f32 %v881, %v957
        %v959 = vpop.f32.mrf.mxu0
        %960 = vdwg.mxu0
        %961 = vmatpush.bf16.msra.mxu0 0
        %962 = vmatpush.bf16.msra.mxu0 0
        %963 = vmatpush.bf16.msra.mxu0 0
        %964 = vmatpush.bf16.msra.mxu0 0
        %965 = vmatpush.bf16.msra.mxu0 0
        %966 = vmatpush.bf16.msra.mxu0 %v933
        %967 = vmatpush.bf16.msra.mxu0 %v913
        %968 = vmatpush.bf16.msra.mxu0 %v910
        %969 = vmatmul.bf16.gmra.mxu0 %v924
        %v970 = vpop.f32.mrf.mxu0
        %v971 = vadd.f32 %v881, %v970
        %v972 = vpop.f32.mrf.mxu0
        %973 = vdwg.mxu0
        %v974 = vstv %s368
        %v975 = vmul.f32 %v974, %v945
        %v976 = vmul.f32 %v974, %v958
        %v977 = vmul.f32 %v974, %v971
        %v978 = vld [vmem:[%s326] sm:$0xff]
        %v979 = vld [vmem:[%s326 + $0x8] sm:$0xf]
        %982 = vst [vmem:[#allocation1] ss:$2 sm:$0xff] %v978
        %s983 = scalar_lea.vmem [#allocation1], 16
        %984 = vst [vmem:[%s983] ss:$2 sm:$0xff] %v979
        %v985 = vld.sshfl [vmem:[#allocation1] sm:$0xff pattern:$0x75316420]
        %v986 = vld.sshfl [vmem:[#allocation1 + $0x8] sm:$0xff pattern:$0x75316420]
        %v987 = vld.sshfl [vmem:[#allocation1 + $0x10] sm:$0xff pattern:$0x75316420]
        %v991 = vadd.f32 %v975, %v985
        %v992 = vadd.f32 %v976, %v986
        %v993 = vadd.f32 %v977, %v987
        %v994 = vmax.f32 %v991, 0.0
        %v995 = vmax.f32 %v992, 0.0
        %v996 = vmax.f32 %v993, 0.0
        %v999 = vrot.slane %v995, 4
        %v1000 = vsel %vm691, %v994, %v999
        %1002 = vst [vmem:[%s364] sm:$0xff] %v1000
        %1003 = vst [vmem:[%s364 + $0x8] sm:$0xf] %v996
        %s1004 = sand.u32 %s215, 1
        %s1005 = scalar_lea.sflag [#allocation7], %s1004
        %s1006 = sand.u32 %s215, 1
        %s1007 = smul.addr %s1006, 12
        %s1008 = scalar_lea.vmem [#allocation10], %s1007
        // Predicated region
        $region61: #{tpu_custom_call.1} parent=51 // pred_check
          %p1009 = pneg %p225
        $region62: #{tpu_custom_call.1} parent=51 // pred_check_branch
          %1011 = sbr.rel (%p1009) target = $region64
        $region63: #{tpu_custom_call.1} parent=51 // pred_region
          %1013 = vsyncadd %s1005, 0
          %s1014 = smul.addr %s29, 3
          %s1015 = smul.addr %s1014, 4
          %s1016 = scalar_lea.hbm %s8, %s1015
          %s1018 = sshll.u32 %s1008, 4
          %s1019 = int_to_ptr.vmem [resolvable:$true] %s1018
          %s1020 = sshll.u32 %s1016, 4
          %s1021 = int_to_ptr.hbm [resolvable:$true] %s1020
          %1023 = dma.vmem_to_hbm [thread:$0]  %s1019, 192, %s1021, %s1005
        $region64: #{tpu_custom_call.1} parent=51 // pred_fallthru
          _
      $region52: #{tpu_custom_call.1} parent=5 // pred_fallthru
        _
      %p1024 = scmp.le.s32.totalorder 2, %s24
      // Predicated region
      $region65: #{tpu_custom_call.1} parent=5 // pred_check
        %p1025 = pneg %p1024
      $region66: #{tpu_custom_call.1} parent=5 // pred_check_branch
        %1027 = sbr.rel (%p1025) target = $region68
      $region67: #{tpu_custom_call.1} parent=5 // pred_region
        %s1028 = ssub.s32 %s24, 2
        // Predicated region
        $region69: #{tpu_custom_call.1} parent=67 // pred_check
          %p1029 = pneg %p231
        $region70: #{tpu_custom_call.1} parent=67 // pred_check_branch
          %1031 = sbr.rel (%p1029) target = $region72
        $region71: #{tpu_custom_call.1} parent=67 // pred_region
          %s1032 = sand.u32 %s216, 1
          %s1033 = scalar_lea.sflag [#allocation7], %s1032
          %s1034 = sand.u32 %s216, 1
          %s1035 = smul.addr %s1034, 12
          %s1036 = scalar_lea.vmem [#allocation10], %s1035
          %1038 = dma.done %s1033, 192
        $region72: #{tpu_custom_call.1} parent=67 // pred_fallthru
          _
      $region68: #{tpu_custom_call.1} parent=5 // pred_fallthru
        _
    $region6: #{tpu_custom_call.1} parent=1 // loop_footer
      %s28 = sadd.s32 1, %s24
    $region7: #{tpu_custom_call.1} parent=1 // loop_footer_branch
      %23 = sbr.rel target = $region3
    $region8: #{tpu_custom_call.1} parent=1 // loop_exit
      _
    %1039 = vsyncpa [#allocation6], 1
    %s1040 = scalar_lea.sflag [#allocation6], 1
    %1041 = vsyncpa %s1040, 1
    %1042 = vsyncpa [#allocation9], 1
    %s1043 = scalar_lea.sflag [#allocation9], 1
    %1044 = vsyncpa %s1043, 1
    %1045 = vsyncpa [#allocation7], 1
    %s1046 = scalar_lea.sflag [#allocation7], 1
    %1047 = vsyncpa %s1046, 1

</llo_original>
